<compile_context>
chip_gen: v7x
topology: tpu7x:2x2x1
jax: 0.10.0
libtpu: 0.0.40
codegen_flags: <defaults>
</compile_context>

<pallas_src>
import numpy as np
import jax
import jax.numpy as jnp
from jax.experimental import pallas as pl
from jax.experimental.pallas import tpu as pltpu

# Small, forward-consistent sizes
D_SYM = 32      # vocabulary size (stands in for len(LETTRES))
D_EMB = 16
D_HIDDEN = 32
SEQ = 8
BATCH = 2


def rnn_kernel(emb_ref, whe_ref, whh_ref, bhid_ref, wout_ref, bout_ref, out_ref):
    """Whole forward pass in one invocation.

    emb_ref : (seq*batch, D_emb)      embeddings (gather + b_emb already applied)
    whe_ref : (D_emb, D_hidden)       emb-part of the concat weight
    whh_ref : (D_hidden, D_hidden)    hidden-part of the concat weight
    bhid_ref: (1, D_hidden)
    wout_ref: (D_hidden, D_sym)
    bout_ref: (1, D_sym)
    out_ref : ((seq+1)*batch, D_sym)  row 0..batch-1 is the zero prefix
    """
    n_in = emb_ref.shape[0]          # seq * batch
    n_out = out_ref.shape[0]         # (seq + 1) * batch
    batch = n_out - n_in
    seq = n_in // batch
    d_hidden = whh_ref.shape[0]
    d_sym = out_ref.shape[1]

    # Hoisted input projection: one matmul for all timesteps (bias added once).
    pre_all = jnp.dot(emb_ref[...], whe_ref[...],
                      preferred_element_type=jnp.float32) + bhid_ref[...]

    whh = whh_ref[...]
    h = jnp.zeros((batch, d_hidden), jnp.float32)

    # Serial recurrence: only h @ W_hh + tanh remains on the critical path.
    # seq is a small static constant, so a fully unrolled static loop is fine.
    hs = []
    for t in range(seq):
        pre_t = pre_all[t * batch:(t + 1) * batch, :]
        h = jnp.tanh(pre_t + jnp.dot(h, whh, preferred_element_type=jnp.float32))
        hs.append(h)

    h_all = jnp.concatenate(hs, axis=0)                      # (seq*batch, D_hidden)

    # Hoisted output projection: one matmul + one contiguous whole-block store.
    out_all = jnp.dot(h_all, wout_ref[...],
                      preferred_element_type=jnp.float32) + bout_ref[...]
    zero_row = jnp.zeros((batch, d_sym), jnp.float32)
    out_ref[...] = jnp.concatenate([zero_row, out_all], axis=0)


def rnn_gen_forward(x_ids, params):
    """x_ids: (SEQ, BATCH) int32 symbol ids. Returns (SEQ+1, BATCH, D_SYM) f32."""
    w_emb_t, b_emb, w_hid_t, b_hid, w_out_t, b_out = params
    seq, batch = x_ids.shape

    # Embedding: the one-hot matmul is exactly a row gather.
    #   one_hot(x) @ W_emb.T + b_emb  ==  W_emb.T[x] + b_emb
    emb_all = w_emb_t[x_ids] + b_emb                         # (seq, batch, D_EMB)
    emb_flat = emb_all.reshape(seq * batch, D_EMB).astype(jnp.float32)

    # Split the concat-weight into emb-part and hidden-part (exact decomposition).
    whe = w_hid_t[:D_EMB, :]                                 # (D_EMB, D_HIDDEN)
    whh = w_hid_t[D_EMB:, :]                                 # (D_HIDDEN, D_HIDDEN)
    b_hid2 = b_hid.reshape(1, D_HIDDEN)
    b_out2 = b_out.reshape(1, D_SYM)

    vmem = pl.BlockSpec(memory_space=pltpu.MemorySpace.VMEM)

    out2d = pl.pallas_call(
        rnn_kernel,
        out_shape=jax.ShapeDtypeStruct(((seq + 1) * batch, D_SYM), jnp.float32),
        in_specs=[vmem, vmem, vmem, vmem, vmem, vmem],
        out_specs=vmem,
    )(emb_flat, whe, whh, b_hid2, w_out_t, b_out2)

    return out2d.reshape(seq + 1, batch, D_SYM)


def rnn_gen_reference(x_ids, params):
    """Pure-JAX reference mirroring the torch forward loop."""
    w_emb_t, b_emb, w_hid_t, b_hid, w_out_t, b_out = params
    seq, batch = x_ids.shape
    oh = jax.nn.one_hot(x_ids, D_SYM, dtype=jnp.float32)
    h = jnp.zeros((batch, D_HIDDEN), jnp.float32)
    outs = [jnp.zeros((batch, D_SYM), jnp.float32)]
    for i in range(seq):
        emb = oh[i] @ w_emb_t + b_emb
        h = jnp.tanh(jnp.concatenate([emb, h], axis=1) @ w_hid_t + b_hid)
        outs.append(h @ w_out_t + b_out)
    return jnp.stack(outs)


def init_params(key):
    """Deterministic nn.Linear-style init (uniform(-1/sqrt(fan_in), 1/sqrt(fan_in))).

    Weights are stored transposed (in, out) so the kernel does x @ W_T + b.
    """
    ks = jax.random.split(key, 6)

    def lin(kw, kb, fan_in, fan_out):
        bound = 1.0 / np.sqrt(fan_in)
        w_t = jax.random.uniform(kw, (fan_in, fan_out), jnp.float32, -bound, bound)
        b = jax.random.uniform(kb, (fan_out,), jnp.float32, -bound, bound)
        return w_t, b

    w_emb_t, b_emb = lin(ks[0], ks[1], D_SYM, D_EMB)                 # linear_emb
    w_hid_t, b_hid = lin(ks[2], ks[3], D_EMB + D_HIDDEN, D_HIDDEN)   # linear_hidden
    w_out_t, b_out = lin(ks[4], ks[5], D_HIDDEN, D_SYM)              # linear_out
    return (w_emb_t, b_emb, w_hid_t, b_hid, w_out_t, b_out)


if __name__ == "__main__":
    key = jax.random.PRNGKey(0)
    k_param, k_x = jax.random.split(key)

    params = init_params(k_param)
    x_ids = jax.random.randint(k_x, (SEQ, BATCH), 0, D_SYM, dtype=jnp.int32)

    out = rnn_gen_forward(x_ids, params)
    out = jax.block_until_ready(out)

    ref = rnn_gen_reference(x_ids, params)
    np.testing.assert_allclose(np.asarray(out), np.asarray(ref),
                               rtol=1e-5, atol=1e-5)

    assert out.shape == (SEQ + 1, BATCH, D_SYM)
    assert np.allclose(np.asarray(out[0]), 0.0)   # zero prefix row, as in torch code

    # TODO(synk): generate() (argmax sampling over `horizon`) and the text-file
    # preprocessing (normalize/code2string) are host-side glue, not kernel work.
    print("KERNEL_OK")
</pallas_src>

<mosaic_0001>
module attributes {stable_mosaic.version = 11 : i64} {
  func.func @rnn_kernel(%arg0: memref<16x16xf32, #tpu.memory_space<vmem>>, %arg1: memref<16x32xf32, #tpu.memory_space<vmem>>, %arg2: memref<32x32xf32, #tpu.memory_space<vmem>>, %arg3: memref<1x32xf32, #tpu.memory_space<vmem>>, %arg4: memref<32x32xf32, #tpu.memory_space<vmem>>, %arg5: memref<1x32xf32, #tpu.memory_space<vmem>>, %arg6: memref<18x32xf32, #tpu.memory_space<vmem>>) attributes {dimension_semantics = [], scalar_prefetch = 0 : i64, scratch_operands = 0 : i64, tpu.core_type = #tpu.core_type<tc>} {
    %c0 = arith.constant 0 : index
    %c0_0 = arith.constant 0 : index
    %0 = vector.load %arg0[%c0, %c0_0] : memref<16x16xf32, #tpu.memory_space<vmem>>, vector<16x16xf32>
    %c0_1 = arith.constant 0 : index
    %c0_2 = arith.constant 0 : index
    %1 = vector.load %arg1[%c0_1, %c0_2] : memref<16x32xf32, #tpu.memory_space<vmem>>, vector<16x32xf32>
    %cst = arith.constant dense<0.000000e+00> : vector<16x32xf32>
    %2 = tpu.matmul %0, %1, %cst {dimension_numbers = #tpu.dot_dimension_numbers<[1], [0], [0], [1], [0, 0, 1, 1], [], []>} : vector<16x16xf32>, vector<16x32xf32>, vector<16x32xf32> -> vector<16x32xf32>
    %c0_3 = arith.constant 0 : index
    %c0_4 = arith.constant 0 : index
    %3 = vector.load %arg3[%c0_3, %c0_4] : memref<1x32xf32, #tpu.memory_space<vmem>>, vector<1x32xf32>
    %4 = vector.broadcast %3 : vector<1x32xf32> to vector<16x32xf32>
    %5 = arith.addf %2, %4 : vector<16x32xf32>
    %c0_5 = arith.constant 0 : index
    %c0_6 = arith.constant 0 : index
    %6 = vector.load %arg2[%c0_5, %c0_6] : memref<32x32xf32, #tpu.memory_space<vmem>>, vector<32x32xf32>
    %cst_7 = arith.constant 0.000000e+00 : f32
    %7 = vector.broadcast %cst_7 : f32 to vector<2x32xf32>
    %8 = vector.extract_strided_slice %5 {offsets = [0, 0], sizes = [2, 32], strides = [1, 1]} : vector<16x32xf32> to vector<2x32xf32>
    %cst_8 = arith.constant dense<0.000000e+00> : vector<2x32xf32>
    %9 = tpu.matmul %7, %6, %cst_8 {dimension_numbers = #tpu.dot_dimension_numbers<[1], [0], [0], [1], [0, 0, 1, 1], [], []>} : vector<2x32xf32>, vector<32x32xf32>, vector<2x32xf32> -> vector<2x32xf32>
    %10 = arith.addf %8, %9 : vector<2x32xf32>
    %11 = math.tanh %10 : vector<2x32xf32>
    %12 = vector.extract_strided_slice %5 {offsets = [2, 0], sizes = [2, 32], strides = [1, 1]} : vector<16x32xf32> to vector<2x32xf32>
    %cst_9 = arith.constant dense<0.000000e+00> : vector<2x32xf32>
    %13 = tpu.matmul %11, %6, %cst_9 {dimension_numbers = #tpu.dot_dimension_numbers<[1], [0], [0], [1], [0, 0, 1, 1], [], []>} : vector<2x32xf32>, vector<32x32xf32>, vector<2x32xf32> -> vector<2x32xf32>
    %14 = arith.addf %12, %13 : vector<2x32xf32>
    %15 = math.tanh %14 : vector<2x32xf32>
    %16 = vector.extract_strided_slice %5 {offsets = [4, 0], sizes = [2, 32], strides = [1, 1]} : vector<16x32xf32> to vector<2x32xf32>
    %cst_10 = arith.constant dense<0.000000e+00> : vector<2x32xf32>
    %17 = tpu.matmul %15, %6, %cst_10 {dimension_numbers = #tpu.dot_dimension_numbers<[1], [0], [0], [1], [0, 0, 1, 1], [], []>} : vector<2x32xf32>, vector<32x32xf32>, vector<2x32xf32> -> vector<2x32xf32>
    %18 = arith.addf %16, %17 : vector<2x32xf32>
    %19 = math.tanh %18 : vector<2x32xf32>
    %20 = vector.extract_strided_slice %5 {offsets = [6, 0], sizes = [2, 32], strides = [1, 1]} : vector<16x32xf32> to vector<2x32xf32>
    %cst_11 = arith.constant dense<0.000000e+00> : vector<2x32xf32>
    %21 = tpu.matmul %19, %6, %cst_11 {dimension_numbers = #tpu.dot_dimension_numbers<[1], [0], [0], [1], [0, 0, 1, 1], [], []>} : vector<2x32xf32>, vector<32x32xf32>, vector<2x32xf32> -> vector<2x32xf32>
    %22 = arith.addf %20, %21 : vector<2x32xf32>
    %23 = math.tanh %22 : vector<2x32xf32>
    %24 = vector.extract_strided_slice %5 {offsets = [8, 0], sizes = [2, 32], strides = [1, 1]} : vector<16x32xf32> to vector<2x32xf32>
    %cst_12 = arith.constant dense<0.000000e+00> : vector<2x32xf32>
    %25 = tpu.matmul %23, %6, %cst_12 {dimension_numbers = #tpu.dot_dimension_numbers<[1], [0], [0], [1], [0, 0, 1, 1], [], []>} : vector<2x32xf32>, vector<32x32xf32>, vector<2x32xf32> -> vector<2x32xf32>
    %26 = arith.addf %24, %25 : vector<2x32xf32>
    %27 = math.tanh %26 : vector<2x32xf32>
    %28 = vector.extract_strided_slice %5 {offsets = [10, 0], sizes = [2, 32], strides = [1, 1]} : vector<16x32xf32> to vector<2x32xf32>
    %cst_13 = arith.constant dense<0.000000e+00> : vector<2x32xf32>
    %29 = tpu.matmul %27, %6, %cst_13 {dimension_numbers = #tpu.dot_dimension_numbers<[1], [0], [0], [1], [0, 0, 1, 1], [], []>} : vector<2x32xf32>, vector<32x32xf32>, vector<2x32xf32> -> vector<2x32xf32>
    %30 = arith.addf %28, %29 : vector<2x32xf32>
    %31 = math.tanh %30 : vector<2x32xf32>
    %32 = vector.extract_strided_slice %5 {offsets = [12, 0], sizes = [2, 32], strides = [1, 1]} : vector<16x32xf32> to vector<2x32xf32>
    %cst_14 = arith.constant dense<0.000000e+00> : vector<2x32xf32>
    %33 = tpu.matmul %31, %6, %cst_14 {dimension_numbers = #tpu.dot_dimension_numbers<[1], [0], [0], [1], [0, 0, 1, 1], [], []>} : vector<2x32xf32>, vector<32x32xf32>, vector<2x32xf32> -> vector<2x32xf32>
    %34 = arith.addf %32, %33 : vector<2x32xf32>
    %35 = math.tanh %34 : vector<2x32xf32>
    %36 = vector.extract_strided_slice %5 {offsets = [14, 0], sizes = [2, 32], strides = [1, 1]} : vector<16x32xf32> to vector<2x32xf32>
    %cst_15 = arith.constant dense<0.000000e+00> : vector<2x32xf32>
    %37 = tpu.matmul %35, %6, %cst_15 {dimension_numbers = #tpu.dot_dimension_numbers<[1], [0], [0], [1], [0, 0, 1, 1], [], []>} : vector<2x32xf32>, vector<32x32xf32>, vector<2x32xf32> -> vector<2x32xf32>
    %38 = arith.addf %36, %37 : vector<2x32xf32>
    %39 = math.tanh %38 : vector<2x32xf32>
    %40 = tpu.concatenate %11, %15, %19, %23, %27, %31, %35, %39 in 0 : vector<2x32xf32>, vector<2x32xf32>, vector<2x32xf32>, vector<2x32xf32>, vector<2x32xf32>, vector<2x32xf32>, vector<2x32xf32>, vector<2x32xf32> -> vector<16x32xf32>
    %c0_16 = arith.constant 0 : index
    %c0_17 = arith.constant 0 : index
    %41 = vector.load %arg4[%c0_16, %c0_17] : memref<32x32xf32, #tpu.memory_space<vmem>>, vector<32x32xf32>
    %cst_18 = arith.constant dense<0.000000e+00> : vector<16x32xf32>
    %42 = tpu.matmul %40, %41, %cst_18 {dimension_numbers = #tpu.dot_dimension_numbers<[1], [0], [0], [1], [0, 0, 1, 1], [], []>} : vector<16x32xf32>, vector<32x32xf32>, vector<16x32xf32> -> vector<16x32xf32>
    %c0_19 = arith.constant 0 : index
    %c0_20 = arith.constant 0 : index
    %43 = vector.load %arg5[%c0_19, %c0_20] : memref<1x32xf32, #tpu.memory_space<vmem>>, vector<1x32xf32>
    %44 = vector.broadcast %43 : vector<1x32xf32> to vector<16x32xf32>
    %45 = arith.addf %42, %44 : vector<16x32xf32>
    %cst_21 = arith.constant 0.000000e+00 : f32
    %46 = vector.broadcast %cst_21 : f32 to vector<2x32xf32>
    %47 = tpu.concatenate %46, %45 in 0 : vector<2x32xf32>, vector<16x32xf32> -> vector<18x32xf32>
    %c0_22 = arith.constant 0 : index
    %c0_23 = arith.constant 0 : index
    %48 = vector.load %arg6[%c0_22, %c0_23] : memref<18x32xf32, #tpu.memory_space<vmem>>, vector<18x32xf32>
    tpu.vector_store %arg6[%c0_22, %c0_23], %47 {strides = array<i32>} : memref<18x32xf32, #tpu.memory_space<vmem>>, vector<18x32xf32>,
    return
  }
}

</mosaic_0001>

<llo_original>
// kernel: tpu_custom_call.1
$region0: #{tpu_custom_call.1}
  #allocation0 [shape = 'u32[]', space=smem, size = 0x4, offset = 0x4, fixed_abs, tag = 'smem constant byte address 0x4 - core index']
  #allocation1 [shape = 'u32[144,128]{1,0:T(1,128)}', space=vmem, size = 0x12000, scoped, tag = 'internal scratch']
  %s0 = inlined_call_operand.hbm [shape: f32[16,16], index: 0, kind: input, shape index: {}]
  %s1 = inlined_call_operand.hbm [shape: f32[16,32], index: 1, kind: input, shape index: {}]
  %s2 = inlined_call_operand.hbm [shape: f32[32,32], index: 2, kind: input, shape index: {}]
  %s3 = inlined_call_operand.vmem [shape: f32[1,32], index: 3, kind: input, shape index: {}]
  %s4 = inlined_call_operand.hbm [shape: f32[32,32], index: 4, kind: input, shape index: {}]
  %s5 = inlined_call_operand.vmem [shape: f32[1,32], index: 5, kind: input, shape index: {}]
  %s6 = inlined_call_operand.hbm [shape: f32[18,32], index: 6, kind: output, shape index: {}]
  %s7 = sld [smem:[#allocation0]]
  $region50: #{tpu_custom_call.1} parent=0
    _
  %s9 = ssub.s32 1, %s7
  %s10 = scalar_select 0, %s9, %s7
  $region1: #{tpu_custom_call.1} parent=0
    #allocation2 [shape = 'u8[8192]{0}', space=vmem, size = 0x2000, scoped, tag = 'input window, operand 0, single buffered']
    #allocation3 [shape = 's32[1]{0}', space=sflag, size = 0x4, scoped, tag = 'scoped memory for tpu_custom_call.1']
    #allocation4 [shape = 's32[1]{0}', space=sflag, size = 0x4, scoped, tag = 'scoped memory for tpu_custom_call.1']
    #allocation5 [shape = 'u8[8192]{0}', space=vmem, size = 0x2000, scoped, tag = 'input window, operand 1, single buffered']
    #allocation6 [shape = 's32[1]{0}', space=sflag, size = 0x4, scoped, tag = 'scoped memory for tpu_custom_call.1']
    #allocation7 [shape = 'u8[16384]{0}', space=vmem, size = 0x4000, scoped, tag = 'input window, operand 2, single buffered']
    #allocation8 [shape = 'u8[16384]{0}', space=vmem, size = 0x4000, scoped, tag = 'input window, operand 4, single buffered']
    #allocation9 [shape = 's32[1]{0}', space=sflag, size = 0x4, scoped, tag = 'scoped memory for tpu_custom_call.1']
    #allocation10 [shape = 'u8[12288]{0}', space=vmem, size = 0x3000, scoped, tag = 'output window, operand 0, single buffered']
    %11 = vsyncpa [#allocation3], 0
    %12 = vsyncpa [#allocation6], 0
    %13 = vsyncpa [#allocation9], 0
    %14 = vsyncpa [#allocation4], 0
    // Predicated region
    $region2: #{tpu_custom_call.1} parent=1 // pred_check
      _
    $region3: #{tpu_custom_call.1} parent=1 // pred_check_branch
      %16 = sbr.rel (0) target = $region5
    $region4: #{tpu_custom_call.1} parent=1 // pred_region
      %s18 = ssub.s32 256, 256
      %19 = vsyncadd [#allocation3], %s18
      %s20 = sshll.u32 [#allocation2], 4
      %s21 = int_to_ptr.vmem [resolvable:$true] %s20
      %26 = dma.hbm_to_vmem [thread:$0]  %s0, 256, %s21, [#allocation3], 128, 128, 8
    $region5: #{tpu_custom_call.1} parent=1 // pred_fallthru
      _
    // Predicated region
    $region6: #{tpu_custom_call.1} parent=1 // pred_check
      _
    $region7: #{tpu_custom_call.1} parent=1 // pred_check_branch
      %28 = sbr.rel (0) target = $region9
    $region8: #{tpu_custom_call.1} parent=1 // pred_region
      %s30 = ssub.s32 256, 256
      %31 = vsyncadd [#allocation6], %s30
      %s32 = sshll.u32 [#allocation5], 4
      %s33 = int_to_ptr.vmem [resolvable:$true] %s32
      %38 = dma.hbm_to_vmem [thread:$0]  %s1, 256, %s33, [#allocation6], 128, 128, 8
    $region9: #{tpu_custom_call.1} parent=1 // pred_fallthru
      _
    // Predicated region
    $region10: #{tpu_custom_call.1} parent=1 // pred_check
      _
    $region11: #{tpu_custom_call.1} parent=1 // pred_check_branch
      %40 = sbr.rel (0) target = $region13
    $region12: #{tpu_custom_call.1} parent=1 // pred_region
      %s42 = ssub.s32 512, 512
      %43 = vsyncadd [#allocation6], %s42
      %s44 = sshll.u32 [#allocation7], 4
      %s45 = int_to_ptr.vmem [resolvable:$true] %s44
      %50 = dma.hbm_to_vmem [thread:$0]  %s2, 512, %s45, [#allocation6], 128, 128, 8
    $region13: #{tpu_custom_call.1} parent=1 // pred_fallthru
      _
    // Predicated region
    $region14: #{tpu_custom_call.1} parent=1 // pred_check
      _
    $region15: #{tpu_custom_call.1} parent=1 // pred_check_branch
      %52 = sbr.rel (0) target = $region17
    $region16: #{tpu_custom_call.1} parent=1 // pred_region
      _
    $region17: #{tpu_custom_call.1} parent=1 // pred_fallthru
      _
    // Predicated region
    $region18: #{tpu_custom_call.1} parent=1 // pred_check
      _
    $region19: #{tpu_custom_call.1} parent=1 // pred_check_branch
      %54 = sbr.rel (0) target = $region21
    $region20: #{tpu_custom_call.1} parent=1 // pred_region
      %s56 = ssub.s32 512, 512
      %57 = vsyncadd [#allocation9], %s56
      %s58 = sshll.u32 [#allocation8], 4
      %s59 = int_to_ptr.vmem [resolvable:$true] %s58
      %64 = dma.hbm_to_vmem [thread:$0]  %s4, 512, %s59, [#allocation9], 128, 128, 8
    $region21: #{tpu_custom_call.1} parent=1 // pred_fallthru
      _
    // Predicated region
    $region22: #{tpu_custom_call.1} parent=1 // pred_check
      _
    $region23: #{tpu_custom_call.1} parent=1 // pred_check_branch
      %66 = sbr.rel (0) target = $region25
    $region24: #{tpu_custom_call.1} parent=1 // pred_region
      _
    $region25: #{tpu_custom_call.1} parent=1 // pred_fallthru
      _
    // Predicated region
    $region26: #{tpu_custom_call.1} parent=1 // pred_check
      _
    $region27: #{tpu_custom_call.1} parent=1 // pred_check_branch
      %68 = sbr.rel (0) target = $region29
    $region28: #{tpu_custom_call.1} parent=1 // pred_region
      %69 = dma.done [#allocation3], 256
    $region29: #{tpu_custom_call.1} parent=1 // pred_fallthru
      _
    // Predicated region
    $region30: #{tpu_custom_call.1} parent=1 // pred_check
      _
    $region31: #{tpu_custom_call.1} parent=1 // pred_check_branch
      %71 = sbr.rel (0) target = $region33
    $region32: #{tpu_custom_call.1} parent=1 // pred_region
      %72 = dma.done [#allocation6], 256
    $region33: #{tpu_custom_call.1} parent=1 // pred_fallthru
      _
    // Predicated region
    $region34: #{tpu_custom_call.1} parent=1 // pred_check
      _
    $region35: #{tpu_custom_call.1} parent=1 // pred_check_branch
      %74 = sbr.rel (0) target = $region37
    $region36: #{tpu_custom_call.1} parent=1 // pred_region
      %75 = dma.done [#allocation6], 512
    $region37: #{tpu_custom_call.1} parent=1 // pred_fallthru
      _
    // Predicated region
    $region38: #{tpu_custom_call.1} parent=1 // pred_check
      _
    $region39: #{tpu_custom_call.1} parent=1 // pred_check_branch
      %77 = sbr.rel (0) target = $region41
    $region40: #{tpu_custom_call.1} parent=1 // pred_region
      %78 = dma.done [#allocation9], 512
    $region41: #{tpu_custom_call.1} parent=1 // pred_fallthru
      _
    %v79 = vld [vmem:[#allocation2] sm:$0xff]
    %v80 = vld [vmem:[#allocation2 + $0x8] sm:$0xff]
    %v81 = vld [vmem:[#allocation5] sm:$0xff]
    %v82 = vld [vmem:[#allocation5 + $0x8] sm:$0xff]
    %v83 = vld [vmem:[%s3] sm:$0x1]
    %v85 = vlaneseq
    %v86 = vshrl.u32 %v85, 7
    %v87 = vsub.s32 0, %v86
    %v88 = vrot.slane %v83, %v87
    %vm90 = vcmask 130048
    %v92 = vsel %vm90, %v79, 0
    %v95 = vsel %vm90, %v80, 0
    %97 = vmatprep.subr.mxu0 0.0
    %98 = vmatpush1.msra.mxu0 %v81
    %99 = vmatprep.subr.mxu0 0.0
    %100 = vmatpush1.msra.mxu0 %v82
    %101 = vmatprep.subr.mxu0 0.0
    %102 = vmatpush1.msra.mxu0 0.0
    %103 = vmatprep.subr.mxu0 0.0
    %104 = vmatpush1.msra.mxu0 0.0
    %105 = vmatprep.subr.mxu0 0.0
    %106 = vmatpush1.msra.mxu0 0.0
    %107 = vmatprep.subr.mxu0 0.0
    %108 = vmatpush1.msra.mxu0 0.0
    %109 = vmatprep.subr.mxu0 0.0
    %110 = vmatpush1.msra.mxu0 0.0
    %111 = vmatprep.subr.mxu0 0.0
    %112 = vmatpush1.msra.mxu0 0.0
    %113 = vmatprep.subr.mxu0 0.0
    %114 = vmatpush1.msra.mxu0 0.0
    %115 = vmatprep.subr.mxu0 0.0
    %116 = vmatpush1.msra.mxu0 0.0
    %117 = vmatprep.subr.mxu0 0.0
    %118 = vmatpush1.msra.mxu0 0.0
    %119 = vmatprep.subr.mxu0 0.0
    %120 = vmatpush1.msra.mxu0 0.0
    %121 = vmatprep.subr.mxu0 0.0
    %122 = vmatpush1.msra.mxu0 0.0
    %123 = vmatprep.subr.mxu0 0.0
    %124 = vmatpush1.msra.mxu0 0.0
    %125 = vmatprep.subr.mxu0 0.0
    %126 = vmatpush1.msra.mxu0 0.0
    %127 = vmatprep.subr.mxu0 0.0
    %128 = vmatpush1.msra.mxu0 0.0
    %129 = vmatprep.subr.mxu0 0.0
    %130 = vmatpush1.msra.mxu0 0.0
    %131 = vmatprep.subr.mxu0 0.0
    %132 = vmatpush1.msra.mxu0 0.0
    %133 = vmatprep.subr.mxu0 0.0
    %134 = vmatpush1.msra.mxu0 0.0
    %135 = vmatprep.subr.mxu0 0.0
    %136 = vmatpush1.msra.mxu0 0.0
    %137 = vmatprep.subr.mxu0 0.0
    %138 = vmatpush1.msra.mxu0 0.0
    %139 = vmatprep.subr.mxu0 0.0
    %140 = vmatpush1.msra.mxu0 0.0
    %141 = vmatprep.subr.mxu0 0.0
    %142 = vmatpush1.msra.mxu0 0.0
    %143 = vmatprep.subr.mxu0 0.0
    %144 = vmatpush1.msra.mxu0 0.0
    %145 = vmatprep.subr.mxu0 0.0
    %146 = vmatpush1.msra.mxu0 0.0
    %147 = vmatprep.subr.mxu0 0.0
    %148 = vmatpush1.msra.mxu0 0.0
    %149 = vmatprep.subr.mxu0 0.0
    %150 = vmatpush1.msra.mxu0 0.0
    %151 = vmatprep.subr.mxu0 0.0
    %152 = vmatpush1.msra.mxu0 0.0
    %153 = vmatprep.subr.mxu0 0.0
    %154 = vmatpush1.msra.mxu0 0.0
    %155 = vmatprep.subr.mxu0 0.0
    %156 = vmatpush1.msra.mxu0 0.0
    %157 = vmatprep.subr.mxu0 0.0
    %158 = vmatpush1.msra.mxu0 0.0
    %159 = vmatprep.subr.mxu0 0.0
    %160 = vmatpush1.msra.mxu0 0.0
    %161 = vmatprep.mubr.f32.mxu0 0.0
    %162 = vmatmul.mubr.f32.gmra.mrb[0].mxu0 %v92
    %v163 = vpop.f32.mrb[0].mxu0
    %v164 = vadd.f32 %v88, %v163
    %v165 = vpop.f32.mrb[0].mxu0
    %166 = vmatprep.mubr.f32.mxu0 0.0
    %167 = vmatmul.mubr.f32.gmra.mrb[0].mxu0 %v95
    %v168 = vpop.f32.mrb[0].mxu0
    %v169 = vadd.f32 %v88, %v168
    %v170 = vpop.f32.mrb[0].mxu0
    %171 = vdwg.mxu0
    %v172 = vld [vmem:[#allocation7] sm:$0xff]
    %v173 = vld [vmem:[#allocation7 + $0x8] sm:$0xff]
    %v174 = vld [vmem:[#allocation7 + $0x10] sm:$0xff]
    %v175 = vld [vmem:[#allocation7 + $0x18] sm:$0xff]
    %vm176 = vcmask 261120
    %v178 = vsel %vm176, 0.0, 0
    %180 = vmatprep.subr.mxu0 0.0
    %181 = vmatpush1.msra.mxu0 %v172
    %182 = vmatprep.subr.mxu0 0.0
    %183 = vmatpush1.msra.mxu0 %v173
    %184 = vmatprep.subr.mxu0 0.0
    %185 = vmatpush1.msra.mxu0 %v174
    %186 = vmatprep.subr.mxu0 0.0
    %187 = vmatpush1.msra.mxu0 %v175
    %188 = vmatprep.subr.mxu0 0.0
    %189 = vmatpush1.msra.mxu0 0.0
    %190 = vmatprep.subr.mxu0 0.0
    %191 = vmatpush1.msra.mxu0 0.0
    %192 = vmatprep.subr.mxu0 0.0
    %193 = vmatpush1.msra.mxu0 0.0
    %194 = vmatprep.subr.mxu0 0.0
    %195 = vmatpush1.msra.mxu0 0.0
    %196 = vmatprep.subr.mxu0 0.0
    %197 = vmatpush1.msra.mxu0 0.0
    %198 = vmatprep.subr.mxu0 0.0
    %199 = vmatpush1.msra.mxu0 0.0
    %200 = vmatprep.subr.mxu0 0.0
    %201 = vmatpush1.msra.mxu0 0.0
    %202 = vmatprep.subr.mxu0 0.0
    %203 = vmatpush1.msra.mxu0 0.0
    %204 = vmatprep.subr.mxu0 0.0
    %205 = vmatpush1.msra.mxu0 0.0
    %206 = vmatprep.subr.mxu0 0.0
    %207 = vmatpush1.msra.mxu0 0.0
    %208 = vmatprep.subr.mxu0 0.0
    %209 = vmatpush1.msra.mxu0 0.0
    %210 = vmatprep.subr.mxu0 0.0
    %211 = vmatpush1.msra.mxu0 0.0
    %212 = vmatprep.subr.mxu0 0.0
    %213 = vmatpush1.msra.mxu0 0.0
    %214 = vmatprep.subr.mxu0 0.0
    %215 = vmatpush1.msra.mxu0 0.0
    %216 = vmatprep.subr.mxu0 0.0
    %217 = vmatpush1.msra.mxu0 0.0
    %218 = vmatprep.subr.mxu0 0.0
    %219 = vmatpush1.msra.mxu0 0.0
    %220 = vmatprep.subr.mxu0 0.0
    %221 = vmatpush1.msra.mxu0 0.0
    %222 = vmatprep.subr.mxu0 0.0
    %223 = vmatpush1.msra.mxu0 0.0
    %224 = vmatprep.subr.mxu0 0.0
    %225 = vmatpush1.msra.mxu0 0.0
    %226 = vmatprep.subr.mxu0 0.0
    %227 = vmatpush1.msra.mxu0 0.0
    %228 = vmatprep.subr.mxu0 0.0
    %229 = vmatpush1.msra.mxu0 0.0
    %230 = vmatprep.subr.mxu0 0.0
    %231 = vmatpush1.msra.mxu0 0.0
    %232 = vmatprep.subr.mxu0 0.0
    %233 = vmatpush1.msra.mxu0 0.0
    %234 = vmatprep.subr.mxu0 0.0
    %235 = vmatpush1.msra.mxu0 0.0
    %236 = vmatprep.subr.mxu0 0.0
    %237 = vmatpush1.msra.mxu0 0.0
    %238 = vmatprep.subr.mxu0 0.0
    %239 = vmatpush1.msra.mxu0 0.0
    %240 = vmatprep.subr.mxu0 0.0
    %241 = vmatpush1.msra.mxu0 0.0
    %242 = vmatprep.subr.mxu0 0.0
    %243 = vmatpush1.msra.mxu0 0.0
    %244 = vmatprep.mubr.f32.mxu0 0.0
    %245 = vmatmul.mubr.f32.gmra.mrb[0].mxu0 %v178
    %v246 = vpop.f32.mrb[0].mxu0
    %v247 = vadd.f32 0.0, %v246
    %v248 = vpop.f32.mrb[0].mxu0
    %249 = vdwg.mxu0
    %v250 = vadd.f32 %v164, %v247
    %v251 = vtanh.pop %v250
    %v253 = vsel %vm176, %v251, 0
    %255 = vmatprep.subr.mxu0 0.0
    %256 = vmatpush1.msra.mxu0 %v172
    %257 = vmatprep.subr.mxu0 0.0
    %258 = vmatpush1.msra.mxu0 %v173
    %259 = vmatprep.subr.mxu0 0.0
    %260 = vmatpush1.msra.mxu0 %v174
    %261 = vmatprep.subr.mxu0 0.0
    %262 = vmatpush1.msra.mxu0 %v175
    %263 = vmatprep.subr.mxu0 0.0
    %264 = vmatpush1.msra.mxu0 0.0
    %265 = vmatprep.subr.mxu0 0.0
    %266 = vmatpush1.msra.mxu0 0.0
    %267 = vmatprep.subr.mxu0 0.0
    %268 = vmatpush1.msra.mxu0 0.0
    %269 = vmatprep.subr.mxu0 0.0
    %270 = vmatpush1.msra.mxu0 0.0
    %271 = vmatprep.subr.mxu0 0.0
    %272 = vmatpush1.msra.mxu0 0.0
    %273 = vmatprep.subr.mxu0 0.0
    %274 = vmatpush1.msra.mxu0 0.0
    %275 = vmatprep.subr.mxu0 0.0
    %276 = vmatpush1.msra.mxu0 0.0
    %277 = vmatprep.subr.mxu0 0.0
    %278 = vmatpush1.msra.mxu0 0.0
    %279 = vmatprep.subr.mxu0 0.0
    %280 = vmatpush1.msra.mxu0 0.0
    %281 = vmatprep.subr.mxu0 0.0
    %282 = vmatpush1.msra.mxu0 0.0
    %283 = vmatprep.subr.mxu0 0.0
    %284 = vmatpush1.msra.mxu0 0.0
    %285 = vmatprep.subr.mxu0 0.0
    %286 = vmatpush1.msra.mxu0 0.0
    %287 = vmatprep.subr.mxu0 0.0
    %288 = vmatpush1.msra.mxu0 0.0
    %289 = vmatprep.subr.mxu0 0.0
    %290 = vmatpush1.msra.mxu0 0.0
    %291 = vmatprep.subr.mxu0 0.0
    %292 = vmatpush1.msra.mxu0 0.0
    %293 = vmatprep.subr.mxu0 0.0
    %294 = vmatpush1.msra.mxu0 0.0
    %295 = vmatprep.subr.mxu0 0.0
    %296 = vmatpush1.msra.mxu0 0.0
    %297 = vmatprep.subr.mxu0 0.0
    %298 = vmatpush1.msra.mxu0 0.0
    %299 = vmatprep.subr.mxu0 0.0
    %300 = vmatpush1.msra.mxu0 0.0
    %301 = vmatprep.subr.mxu0 0.0
    %302 = vmatpush1.msra.mxu0 0.0
    %303 = vmatprep.subr.mxu0 0.0
    %304 = vmatpush1.msra.mxu0 0.0
    %305 = vmatprep.subr.mxu0 0.0
    %306 = vmatpush1.msra.mxu0 0.0
    %307 = vmatprep.subr.mxu0 0.0
    %308 = vmatpush1.msra.mxu0 0.0
    %309 = vmatprep.subr.mxu0 0.0
    %310 = vmatpush1.msra.mxu0 0.0
    %311 = vmatprep.subr.mxu0 0.0
    %312 = vmatpush1.msra.mxu0 0.0
    %313 = vmatprep.subr.mxu0 0.0
    %314 = vmatpush1.msra.mxu0 0.0
    %315 = vmatprep.subr.mxu0 0.0
    %316 = vmatpush1.msra.mxu0 0.0
    %317 = vmatprep.subr.mxu0 0.0
    %318 = vmatpush1.msra.mxu0 0.0
    %319 = vmatprep.mubr.f32.mxu0 0.0
    %320 = vmatmul.mubr.f32.gmra.mrb[0].mxu0 %v253
    %v321 = vpop.f32.mrb[0].mxu0
    %v322 = vadd.f32 0.0, %v321
    %v323 = vpop.f32.mrb[0].mxu0
    %324 = vdwg.mxu0
    %v326 = vrot.slane %v322, 6
    %v328 = vadd.f32 %v164, %v326
    %v329 = vtanh.pop %v328
    %v331 = vrot.slane %v329, 2
    %v332 = vsel %vm176, %v331, 0
    %334 = vmatprep.subr.mxu0 0.0
    %335 = vmatpush1.msra.mxu0 %v172
    %336 = vmatprep.subr.mxu0 0.0
    %337 = vmatpush1.msra.mxu0 %v173
    %338 = vmatprep.subr.mxu0 0.0
    %339 = vmatpush1.msra.mxu0 %v174
    %340 = vmatprep.subr.mxu0 0.0
    %341 = vmatpush1.msra.mxu0 %v175
    %342 = vmatprep.subr.mxu0 0.0
    %343 = vmatpush1.msra.mxu0 0.0
    %344 = vmatprep.subr.mxu0 0.0
    %345 = vmatpush1.msra.mxu0 0.0
    %346 = vmatprep.subr.mxu0 0.0
    %347 = vmatpush1.msra.mxu0 0.0
    %348 = vmatprep.subr.mxu0 0.0
    %349 = vmatpush1.msra.mxu0 0.0
    %350 = vmatprep.subr.mxu0 0.0
    %351 = vmatpush1.msra.mxu0 0.0
    %352 = vmatprep.subr.mxu0 0.0
    %353 = vmatpush1.msra.mxu0 0.0
    %354 = vmatprep.subr.mxu0 0.0
    %355 = vmatpush1.msra.mxu0 0.0
    %356 = vmatprep.subr.mxu0 0.0
    %357 = vmatpush1.msra.mxu0 0.0
    %358 = vmatprep.subr.mxu0 0.0
    %359 = vmatpush1.msra.mxu0 0.0
    %360 = vmatprep.subr.mxu0 0.0
    %361 = vmatpush1.msra.mxu0 0.0
    %362 = vmatprep.subr.mxu0 0.0
    %363 = vmatpush1.msra.mxu0 0.0
    %364 = vmatprep.subr.mxu0 0.0
    %365 = vmatpush1.msra.mxu0 0.0
    %366 = vmatprep.subr.mxu0 0.0
    %367 = vmatpush1.msra.mxu0 0.0
    %368 = vmatprep.subr.mxu0 0.0
    %369 = vmatpush1.msra.mxu0 0.0
    %370 = vmatprep.subr.mxu0 0.0
    %371 = vmatpush1.msra.mxu0 0.0
    %372 = vmatprep.subr.mxu0 0.0
    %373 = vmatpush1.msra.mxu0 0.0
    %374 = vmatprep.subr.mxu0 0.0
    %375 = vmatpush1.msra.mxu0 0.0
    %376 = vmatprep.subr.mxu0 0.0
    %377 = vmatpush1.msra.mxu0 0.0
    %378 = vmatprep.subr.mxu0 0.0
    %379 = vmatpush1.msra.mxu0 0.0
    %380 = vmatprep.subr.mxu0 0.0
    %381 = vmatpush1.msra.mxu0 0.0
    %382 = vmatprep.subr.mxu0 0.0
    %383 = vmatpush1.msra.mxu0 0.0
    %384 = vmatprep.subr.mxu0 0.0
    %385 = vmatpush1.msra.mxu0 0.0
    %386 = vmatprep.subr.mxu0 0.0
    %387 = vmatpush1.msra.mxu0 0.0
    %388 = vmatprep.subr.mxu0 0.0
    %389 = vmatpush1.msra.mxu0 0.0
    %390 = vmatprep.subr.mxu0 0.0
    %391 = vmatpush1.msra.mxu0 0.0
    %392 = vmatprep.subr.mxu0 0.0
    %393 = vmatpush1.msra.mxu0 0.0
    %394 = vmatprep.subr.mxu0 0.0
    %395 = vmatpush1.msra.mxu0 0.0
    %396 = vmatprep.subr.mxu0 0.0
    %397 = vmatpush1.msra.mxu0 0.0
    %398 = vmatprep.mubr.f32.mxu0 0.0
    %399 = vmatmul.mubr.f32.gmra.mrb[0].mxu0 %v332
    %v400 = vpop.f32.mrb[0].mxu0
    %v401 = vadd.f32 0.0, %v400
    %v402 = vpop.f32.mrb[0].mxu0
    %403 = vdwg.mxu0
    %v405 = vrot.slane %v401, 4
    %v407 = vadd.f32 %v164, %v405
    %v408 = vtanh.pop %v407
    %v410 = vrot.slane %v408, 4
    %v411 = vsel %vm176, %v410, 0
    %413 = vmatprep.subr.mxu0 0.0
    %414 = vmatpush1.msra.mxu0 %v172
    %415 = vmatprep.subr.mxu0 0.0
    %416 = vmatpush1.msra.mxu0 %v173
    %417 = vmatprep.subr.mxu0 0.0
    %418 = vmatpush1.msra.mxu0 %v174
    %419 = vmatprep.subr.mxu0 0.0
    %420 = vmatpush1.msra.mxu0 %v175
    %421 = vmatprep.subr.mxu0 0.0
    %422 = vmatpush1.msra.mxu0 0.0
    %423 = vmatprep.subr.mxu0 0.0
    %424 = vmatpush1.msra.mxu0 0.0
    %425 = vmatprep.subr.mxu0 0.0
    %426 = vmatpush1.msra.mxu0 0.0
    %427 = vmatprep.subr.mxu0 0.0
    %428 = vmatpush1.msra.mxu0 0.0
    %429 = vmatprep.subr.mxu0 0.0
    %430 = vmatpush1.msra.mxu0 0.0
    %431 = vmatprep.subr.mxu0 0.0
    %432 = vmatpush1.msra.mxu0 0.0
    %433 = vmatprep.subr.mxu0 0.0
    %434 = vmatpush1.msra.mxu0 0.0
    %435 = vmatprep.subr.mxu0 0.0
    %436 = vmatpush1.msra.mxu0 0.0
    %437 = vmatprep.subr.mxu0 0.0
    %438 = vmatpush1.msra.mxu0 0.0
    %439 = vmatprep.subr.mxu0 0.0
    %440 = vmatpush1.msra.mxu0 0.0
    %441 = vmatprep.subr.mxu0 0.0
    %442 = vmatpush1.msra.mxu0 0.0
    %443 = vmatprep.subr.mxu0 0.0
    %444 = vmatpush1.msra.mxu0 0.0
    %445 = vmatprep.subr.mxu0 0.0
    %446 = vmatpush1.msra.mxu0 0.0
    %447 = vmatprep.subr.mxu0 0.0
    %448 = vmatpush1.msra.mxu0 0.0
    %449 = vmatprep.subr.mxu0 0.0
    %450 = vmatpush1.msra.mxu0 0.0
    %451 = vmatprep.subr.mxu0 0.0
    %452 = vmatpush1.msra.mxu0 0.0
    %453 = vmatprep.subr.mxu0 0.0
    %454 = vmatpush1.msra.mxu0 0.0
    %455 = vmatprep.subr.mxu0 0.0
    %456 = vmatpush1.msra.mxu0 0.0
    %457 = vmatprep.subr.mxu0 0.0
    %458 = vmatpush1.msra.mxu0 0.0
    %459 = vmatprep.subr.mxu0 0.0
    %460 = vmatpush1.msra.mxu0 0.0
    %461 = vmatprep.subr.mxu0 0.0
    %462 = vmatpush1.msra.mxu0 0.0
    %463 = vmatprep.subr.mxu0 0.0
    %464 = vmatpush1.msra.mxu0 0.0
    %465 = vmatprep.subr.mxu0 0.0
    %466 = vmatpush1.msra.mxu0 0.0
    %467 = vmatprep.subr.mxu0 0.0
    %468 = vmatpush1.msra.mxu0 0.0
    %469 = vmatprep.subr.mxu0 0.0
    %470 = vmatpush1.msra.mxu0 0.0
    %471 = vmatprep.subr.mxu0 0.0
    %472 = vmatpush1.msra.mxu0 0.0
    %473 = vmatprep.subr.mxu0 0.0
    %474 = vmatpush1.msra.mxu0 0.0
    %475 = vmatprep.subr.mxu0 0.0
    %476 = vmatpush1.msra.mxu0 0.0
    %477 = vmatprep.mubr.f32.mxu0 0.0
    %478 = vmatmul.mubr.f32.gmra.mrb[0].mxu0 %v411
    %v479 = vpop.f32.mrb[0].mxu0
    %v480 = vadd.f32 0.0, %v479
    %v481 = vpop.f32.mrb[0].mxu0
    %482 = vdwg.mxu0
    %v484 = vrot.slane %v480, 2
    %v486 = vadd.f32 %v164, %v484
    %v487 = vtanh.pop %v486
    %v489 = vrot.slane %v487, 6
    %v490 = vsel %vm176, %v489, 0
    %492 = vmatprep.subr.mxu0 0.0
    %493 = vmatpush1.msra.mxu0 %v172
    %494 = vmatprep.subr.mxu0 0.0
    %495 = vmatpush1.msra.mxu0 %v173
    %496 = vmatprep.subr.mxu0 0.0
    %497 = vmatpush1.msra.mxu0 %v174
    %498 = vmatprep.subr.mxu0 0.0
    %499 = vmatpush1.msra.mxu0 %v175
    %500 = vmatprep.subr.mxu0 0.0
    %501 = vmatpush1.msra.mxu0 0.0
    %502 = vmatprep.subr.mxu0 0.0
    %503 = vmatpush1.msra.mxu0 0.0
    %504 = vmatprep.subr.mxu0 0.0
    %505 = vmatpush1.msra.mxu0 0.0
    %506 = vmatprep.subr.mxu0 0.0
    %507 = vmatpush1.msra.mxu0 0.0
    %508 = vmatprep.subr.mxu0 0.0
    %509 = vmatpush1.msra.mxu0 0.0
    %510 = vmatprep.subr.mxu0 0.0
    %511 = vmatpush1.msra.mxu0 0.0
    %512 = vmatprep.subr.mxu0 0.0
    %513 = vmatpush1.msra.mxu0 0.0
    %514 = vmatprep.subr.mxu0 0.0
    %515 = vmatpush1.msra.mxu0 0.0
    %516 = vmatprep.subr.mxu0 0.0
    %517 = vmatpush1.msra.mxu0 0.0
    %518 = vmatprep.subr.mxu0 0.0
    %519 = vmatpush1.msra.mxu0 0.0
    %520 = vmatprep.subr.mxu0 0.0
    %521 = vmatpush1.msra.mxu0 0.0
    %522 = vmatprep.subr.mxu0 0.0
    %523 = vmatpush1.msra.mxu0 0.0
    %524 = vmatprep.subr.mxu0 0.0
    %525 = vmatpush1.msra.mxu0 0.0
    %526 = vmatprep.subr.mxu0 0.0
    %527 = vmatpush1.msra.mxu0 0.0
    %528 = vmatprep.subr.mxu0 0.0
    %529 = vmatpush1.msra.mxu0 0.0
    %530 = vmatprep.subr.mxu0 0.0
    %531 = vmatpush1.msra.mxu0 0.0
    %532 = vmatprep.subr.mxu0 0.0
    %533 = vmatpush1.msra.mxu0 0.0
    %534 = vmatprep.subr.mxu0 0.0
    %535 = vmatpush1.msra.mxu0 0.0
    %536 = vmatprep.subr.mxu0 0.0
    %537 = vmatpush1.msra.mxu0 0.0
    %538 = vmatprep.subr.mxu0 0.0
    %539 = vmatpush1.msra.mxu0 0.0
    %540 = vmatprep.subr.mxu0 0.0
    %541 = vmatpush1.msra.mxu0 0.0
    %542 = vmatprep.subr.mxu0 0.0
    %543 = vmatpush1.msra.mxu0 0.0
    %544 = vmatprep.subr.mxu0 0.0
    %545 = vmatpush1.msra.mxu0 0.0
    %546 = vmatprep.subr.mxu0 0.0
    %547 = vmatpush1.msra.mxu0 0.0
    %548 = vmatprep.subr.mxu0 0.0
    %549 = vmatpush1.msra.mxu0 0.0
    %550 = vmatprep.subr.mxu0 0.0
    %551 = vmatpush1.msra.mxu0 0.0
    %552 = vmatprep.subr.mxu0 0.0
    %553 = vmatpush1.msra.mxu0 0.0
    %554 = vmatprep.subr.mxu0 0.0
    %555 = vmatpush1.msra.mxu0 0.0
    %556 = vmatprep.mubr.f32.mxu0 0.0
    %557 = vmatmul.mubr.f32.gmra.mrb[0].mxu0 %v490
    %v558 = vpop.f32.mrb[0].mxu0
    %v559 = vadd.f32 0.0, %v558
    %v560 = vpop.f32.mrb[0].mxu0
    %561 = vdwg.mxu0
    %v562 = vadd.f32 %v169, %v559
    %v563 = vtanh.pop %v562
    %v565 = vsel %vm176, %v563, 0
    %567 = vmatprep.subr.mxu0 0.0
    %568 = vmatpush1.msra.mxu0 %v172
    %569 = vmatprep.subr.mxu0 0.0
    %570 = vmatpush1.msra.mxu0 %v173
    %571 = vmatprep.subr.mxu0 0.0
    %572 = vmatpush1.msra.mxu0 %v174
    %573 = vmatprep.subr.mxu0 0.0
    %574 = vmatpush1.msra.mxu0 %v175
    %575 = vmatprep.subr.mxu0 0.0
    %576 = vmatpush1.msra.mxu0 0.0
    %577 = vmatprep.subr.mxu0 0.0
    %578 = vmatpush1.msra.mxu0 0.0
    %579 = vmatprep.subr.mxu0 0.0
    %580 = vmatpush1.msra.mxu0 0.0
    %581 = vmatprep.subr.mxu0 0.0
    %582 = vmatpush1.msra.mxu0 0.0
    %583 = vmatprep.subr.mxu0 0.0
    %584 = vmatpush1.msra.mxu0 0.0
    %585 = vmatprep.subr.mxu0 0.0
    %586 = vmatpush1.msra.mxu0 0.0
    %587 = vmatprep.subr.mxu0 0.0
    %588 = vmatpush1.msra.mxu0 0.0
    %589 = vmatprep.subr.mxu0 0.0
    %590 = vmatpush1.msra.mxu0 0.0
    %591 = vmatprep.subr.mxu0 0.0
    %592 = vmatpush1.msra.mxu0 0.0
    %593 = vmatprep.subr.mxu0 0.0
    %594 = vmatpush1.msra.mxu0 0.0
    %595 = vmatprep.subr.mxu0 0.0
    %596 = vmatpush1.msra.mxu0 0.0
    %597 = vmatprep.subr.mxu0 0.0
    %598 = vmatpush1.msra.mxu0 0.0
    %599 = vmatprep.subr.mxu0 0.0
    %600 = vmatpush1.msra.mxu0 0.0
    %601 = vmatprep.subr.mxu0 0.0
    %602 = vmatpush1.msra.mxu0 0.0
    %603 = vmatprep.subr.mxu0 0.0
    %604 = vmatpush1.msra.mxu0 0.0
    %605 = vmatprep.subr.mxu0 0.0
    %606 = vmatpush1.msra.mxu0 0.0
    %607 = vmatprep.subr.mxu0 0.0
    %608 = vmatpush1.msra.mxu0 0.0
    %609 = vmatprep.subr.mxu0 0.0
    %610 = vmatpush1.msra.mxu0 0.0
    %611 = vmatprep.subr.mxu0 0.0
    %612 = vmatpush1.msra.mxu0 0.0
    %613 = vmatprep.subr.mxu0 0.0
    %614 = vmatpush1.msra.mxu0 0.0
    %615 = vmatprep.subr.mxu0 0.0
    %616 = vmatpush1.msra.mxu0 0.0
    %617 = vmatprep.subr.mxu0 0.0
    %618 = vmatpush1.msra.mxu0 0.0
    %619 = vmatprep.subr.mxu0 0.0
    %620 = vmatpush1.msra.mxu0 0.0
    %621 = vmatprep.subr.mxu0 0.0
    %622 = vmatpush1.msra.mxu0 0.0
    %623 = vmatprep.subr.mxu0 0.0
    %624 = vmatpush1.msra.mxu0 0.0
    %625 = vmatprep.subr.mxu0 0.0
    %626 = vmatpush1.msra.mxu0 0.0
    %627 = vmatprep.subr.mxu0 0.0
    %628 = vmatpush1.msra.mxu0 0.0
    %629 = vmatprep.subr.mxu0 0.0
    %630 = vmatpush1.msra.mxu0 0.0
    %631 = vmatprep.mubr.f32.mxu0 0.0
    %632 = vmatmul.mubr.f32.gmra.mrb[0].mxu0 %v565
    %v633 = vpop.f32.mrb[0].mxu0
    %v634 = vadd.f32 0.0, %v633
    %v635 = vpop.f32.mrb[0].mxu0
    %636 = vdwg.mxu0
    %v638 = vrot.slane %v634, 6
    %v640 = vadd.f32 %v169, %v638
    %v641 = vtanh.pop %v640
    %v643 = vrot.slane %v641, 2
    %v644 = vsel %vm176, %v643, 0
    %646 = vmatprep.subr.mxu0 0.0
    %647 = vmatpush1.msra.mxu0 %v172
    %648 = vmatprep.subr.mxu0 0.0
    %649 = vmatpush1.msra.mxu0 %v173
    %650 = vmatprep.subr.mxu0 0.0
    %651 = vmatpush1.msra.mxu0 %v174
    %652 = vmatprep.subr.mxu0 0.0
    %653 = vmatpush1.msra.mxu0 %v175
    %654 = vmatprep.subr.mxu0 0.0
    %655 = vmatpush1.msra.mxu0 0.0
    %656 = vmatprep.subr.mxu0 0.0
    %657 = vmatpush1.msra.mxu0 0.0
    %658 = vmatprep.subr.mxu0 0.0
    %659 = vmatpush1.msra.mxu0 0.0
    %660 = vmatprep.subr.mxu0 0.0
    %661 = vmatpush1.msra.mxu0 0.0
    %662 = vmatprep.subr.mxu0 0.0
    %663 = vmatpush1.msra.mxu0 0.0
    %664 = vmatprep.subr.mxu0 0.0
    %665 = vmatpush1.msra.mxu0 0.0
    %666 = vmatprep.subr.mxu0 0.0
    %667 = vmatpush1.msra.mxu0 0.0
    %668 = vmatprep.subr.mxu0 0.0
    %669 = vmatpush1.msra.mxu0 0.0
    %670 = vmatprep.subr.mxu0 0.0
    %671 = vmatpush1.msra.mxu0 0.0
    %672 = vmatprep.subr.mxu0 0.0
    %673 = vmatpush1.msra.mxu0 0.0
    %674 = vmatprep.subr.mxu0 0.0
    %675 = vmatpush1.msra.mxu0 0.0
    %676 = vmatprep.subr.mxu0 0.0
    %677 = vmatpush1.msra.mxu0 0.0
    %678 = vmatprep.subr.mxu0 0.0
    %679 = vmatpush1.msra.mxu0 0.0
    %680 = vmatprep.subr.mxu0 0.0
    %681 = vmatpush1.msra.mxu0 0.0
    %682 = vmatprep.subr.mxu0 0.0
    %683 = vmatpush1.msra.mxu0 0.0
    %684 = vmatprep.subr.mxu0 0.0
    %685 = vmatpush1.msra.mxu0 0.0
    %686 = vmatprep.subr.mxu0 0.0
    %687 = vmatpush1.msra.mxu0 0.0
    %688 = vmatprep.subr.mxu0 0.0
    %689 = vmatpush1.msra.mxu0 0.0
    %690 = vmatprep.subr.mxu0 0.0
    %691 = vmatpush1.msra.mxu0 0.0
    %692 = vmatprep.subr.mxu0 0.0
    %693 = vmatpush1.msra.mxu0 0.0
    %694 = vmatprep.subr.mxu0 0.0
    %695 = vmatpush1.msra.mxu0 0.0
    %696 = vmatprep.subr.mxu0 0.0
    %697 = vmatpush1.msra.mxu0 0.0
    %698 = vmatprep.subr.mxu0 0.0
    %699 = vmatpush1.msra.mxu0 0.0
    %700 = vmatprep.subr.mxu0 0.0
    %701 = vmatpush1.msra.mxu0 0.0
    %702 = vmatprep.subr.mxu0 0.0
    %703 = vmatpush1.msra.mxu0 0.0
    %704 = vmatprep.subr.mxu0 0.0
    %705 = vmatpush1.msra.mxu0 0.0
    %706 = vmatprep.subr.mxu0 0.0
    %707 = vmatpush1.msra.mxu0 0.0
    %708 = vmatprep.subr.mxu0 0.0
    %709 = vmatpush1.msra.mxu0 0.0
    %710 = vmatprep.mubr.f32.mxu0 0.0
    %711 = vmatmul.mubr.f32.gmra.mrb[0].mxu0 %v644
    %v712 = vpop.f32.mrb[0].mxu0
    %v713 = vadd.f32 0.0, %v712
    %v714 = vpop.f32.mrb[0].mxu0
    %715 = vdwg.mxu0
    %v717 = vrot.slane %v713, 4
    %v719 = vadd.f32 %v169, %v717
    %v720 = vtanh.pop %v719
    %v722 = vrot.slane %v720, 4
    %v723 = vsel %vm176, %v722, 0
    %725 = vmatprep.subr.mxu0 0.0
    %726 = vmatpush1.msra.mxu0 %v172
    %727 = vmatprep.subr.mxu0 0.0
    %728 = vmatpush1.msra.mxu0 %v173
    %729 = vmatprep.subr.mxu0 0.0
    %730 = vmatpush1.msra.mxu0 %v174
    %731 = vmatprep.subr.mxu0 0.0
    %732 = vmatpush1.msra.mxu0 %v175
    %733 = vmatprep.subr.mxu0 0.0
    %734 = vmatpush1.msra.mxu0 0.0
    %735 = vmatprep.subr.mxu0 0.0
    %736 = vmatpush1.msra.mxu0 0.0
    %737 = vmatprep.subr.mxu0 0.0
    %738 = vmatpush1.msra.mxu0 0.0
    %739 = vmatprep.subr.mxu0 0.0
    %740 = vmatpush1.msra.mxu0 0.0
    %741 = vmatprep.subr.mxu0 0.0
    %742 = vmatpush1.msra.mxu0 0.0
    %743 = vmatprep.subr.mxu0 0.0
    %744 = vmatpush1.msra.mxu0 0.0
    %745 = vmatprep.subr.mxu0 0.0
    %746 = vmatpush1.msra.mxu0 0.0
    %747 = vmatprep.subr.mxu0 0.0
    %748 = vmatpush1.msra.mxu0 0.0
    %749 = vmatprep.subr.mxu0 0.0
    %750 = vmatpush1.msra.mxu0 0.0
    %751 = vmatprep.subr.mxu0 0.0
    %752 = vmatpush1.msra.mxu0 0.0
    %753 = vmatprep.subr.mxu0 0.0
    %754 = vmatpush1.msra.mxu0 0.0
    %755 = vmatprep.subr.mxu0 0.0
    %756 = vmatpush1.msra.mxu0 0.0
    %757 = vmatprep.subr.mxu0 0.0
    %758 = vmatpush1.msra.mxu0 0.0
    %759 = vmatprep.subr.mxu0 0.0
    %760 = vmatpush1.msra.mxu0 0.0
    %761 = vmatprep.subr.mxu0 0.0
    %762 = vmatpush1.msra.mxu0 0.0
    %763 = vmatprep.subr.mxu0 0.0
    %764 = vmatpush1.msra.mxu0 0.0
    %765 = vmatprep.subr.mxu0 0.0
    %766 = vmatpush1.msra.mxu0 0.0
    %767 = vmatprep.subr.mxu0 0.0
    %768 = vmatpush1.msra.mxu0 0.0
    %769 = vmatprep.subr.mxu0 0.0
    %770 = vmatpush1.msra.mxu0 0.0
    %771 = vmatprep.subr.mxu0 0.0
    %772 = vmatpush1.msra.mxu0 0.0
    %773 = vmatprep.subr.mxu0 0.0
    %774 = vmatpush1.msra.mxu0 0.0
    %775 = vmatprep.subr.mxu0 0.0
    %776 = vmatpush1.msra.mxu0 0.0
    %777 = vmatprep.subr.mxu0 0.0
    %778 = vmatpush1.msra.mxu0 0.0
    %779 = vmatprep.subr.mxu0 0.0
    %780 = vmatpush1.msra.mxu0 0.0
    %781 = vmatprep.subr.mxu0 0.0
    %782 = vmatpush1.msra.mxu0 0.0
    %783 = vmatprep.subr.mxu0 0.0
    %784 = vmatpush1.msra.mxu0 0.0
    %785 = vmatprep.subr.mxu0 0.0
    %786 = vmatpush1.msra.mxu0 0.0
    %787 = vmatprep.subr.mxu0 0.0
    %788 = vmatpush1.msra.mxu0 0.0
    %789 = vmatprep.mubr.f32.mxu0 0.0
    %790 = vmatmul.mubr.f32.gmra.mrb[0].mxu0 %v723
    %v791 = vpop.f32.mrb[0].mxu0
    %v792 = vadd.f32 0.0, %v791
    %v793 = vpop.f32.mrb[0].mxu0
    %794 = vdwg.mxu0
    %v796 = vrot.slane %v792, 2
    %v798 = vadd.f32 %v169, %v796
    %v799 = vtanh.pop %v798
    %vm800 = vcmask 1041408
    %v801 = vsel %vm800, %v251, %v329
    %vm802 = vcmask 1043456
    %v803 = vsel %vm802, %v801, %v408
    %vm804 = vcmask 1045504
    %v805 = vsel %vm804, %v803, %v487
    %v806 = vsel %vm800, %v563, %v641
    %v807 = vsel %vm802, %v806, %v720
    %v808 = vsel %vm804, %v807, %v799
    %v809 = vld [vmem:[#allocation8] sm:$0xff]
    %v810 = vld [vmem:[#allocation8 + $0x8] sm:$0xff]
    %v811 = vld [vmem:[#allocation8 + $0x10] sm:$0xff]
    %v812 = vld [vmem:[#allocation8 + $0x18] sm:$0xff]
    %v813 = vld [vmem:[%s5] sm:$0x1]
    %v815 = vlaneseq
    %v816 = vshrl.u32 %v815, 7
    %v817 = vsub.s32 0, %v816
    %v818 = vrot.slane %v813, %v817
    %v821 = vsel %vm176, %v805, 0
    %v824 = vsel %vm176, %v808, 0
    %826 = vmatprep.subr.mxu0 0.0
    %827 = vmatpush1.msra.mxu0 %v809
    %828 = vmatprep.subr.mxu0 0.0
    %829 = vmatpush1.msra.mxu0 %v810
    %830 = vmatprep.subr.mxu0 0.0
    %831 = vmatpush1.msra.mxu0 %v811
    %832 = vmatprep.subr.mxu0 0.0
    %833 = vmatpush1.msra.mxu0 %v812
    %834 = vmatprep.subr.mxu0 0.0
    %835 = vmatpush1.msra.mxu0 0.0
    %836 = vmatprep.subr.mxu0 0.0
    %837 = vmatpush1.msra.mxu0 0.0
    %838 = vmatprep.subr.mxu0 0.0
    %839 = vmatpush1.msra.mxu0 0.0
    %840 = vmatprep.subr.mxu0 0.0
    %841 = vmatpush1.msra.mxu0 0.0
    %842 = vmatprep.subr.mxu0 0.0
    %843 = vmatpush1.msra.mxu0 0.0
    %844 = vmatprep.subr.mxu0 0.0
    %845 = vmatpush1.msra.mxu0 0.0
    %846 = vmatprep.subr.mxu0 0.0
    %847 = vmatpush1.msra.mxu0 0.0
    %848 = vmatprep.subr.mxu0 0.0
    %849 = vmatpush1.msra.mxu0 0.0
    %850 = vmatprep.subr.mxu0 0.0
    %851 = vmatpush1.msra.mxu0 0.0
    %852 = vmatprep.subr.mxu0 0.0
    %853 = vmatpush1.msra.mxu0 0.0
    %854 = vmatprep.subr.mxu0 0.0
    %855 = vmatpush1.msra.mxu0 0.0
    %856 = vmatprep.subr.mxu0 0.0
    %857 = vmatpush1.msra.mxu0 0.0
    %858 = vmatprep.subr.mxu0 0.0
    %859 = vmatpush1.msra.mxu0 0.0
    %860 = vmatprep.subr.mxu0 0.0
    %861 = vmatpush1.msra.mxu0 0.0
    %862 = vmatprep.subr.mxu0 0.0
    %863 = vmatpush1.msra.mxu0 0.0
    %864 = vmatprep.subr.mxu0 0.0
    %865 = vmatpush1.msra.mxu0 0.0
    %866 = vmatprep.subr.mxu0 0.0
    %867 = vmatpush1.msra.mxu0 0.0
    %868 = vmatprep.subr.mxu0 0.0
    %869 = vmatpush1.msra.mxu0 0.0
    %870 = vmatprep.subr.mxu0 0.0
    %871 = vmatpush1.msra.mxu0 0.0
    %872 = vmatprep.subr.mxu0 0.0
    %873 = vmatpush1.msra.mxu0 0.0
    %874 = vmatprep.subr.mxu0 0.0
    %875 = vmatpush1.msra.mxu0 0.0
    %876 = vmatprep.subr.mxu0 0.0
    %877 = vmatpush1.msra.mxu0 0.0
    %878 = vmatprep.subr.mxu0 0.0
    %879 = vmatpush1.msra.mxu0 0.0
    %880 = vmatprep.subr.mxu0 0.0
    %881 = vmatpush1.msra.mxu0 0.0
    %882 = vmatprep.subr.mxu0 0.0
    %883 = vmatpush1.msra.mxu0 0.0
    %884 = vmatprep.subr.mxu0 0.0
    %885 = vmatpush1.msra.mxu0 0.0
    %886 = vmatprep.subr.mxu0 0.0
    %887 = vmatpush1.msra.mxu0 0.0
    %888 = vmatprep.subr.mxu0 0.0
    %889 = vmatpush1.msra.mxu0 0.0
    %890 = vmatprep.mubr.f32.mxu0 0.0
    %891 = vmatmul.mubr.f32.gmra.mrb[0].mxu0 %v821
    %v892 = vpop.f32.mrb[0].mxu0
    %v893 = vadd.f32 %v818, %v892
    %v894 = vpop.f32.mrb[0].mxu0
    %895 = vmatprep.mubr.f32.mxu0 0.0
    %896 = vmatmul.mubr.f32.gmra.mrb[0].mxu0 %v824
    %v897 = vpop.f32.mrb[0].mxu0
    %v898 = vadd.f32 %v818, %v897
    %v899 = vpop.f32.mrb[0].mxu0
    %900 = vdwg.mxu0
    %v903 = vrot.slane %v893, 6
    %v904 = vrot.slane %v898, 6
    %v905 = vsel %vm800, %v903, %v904
    %v909 = vsel %vm800, 0.0, %v903
    %910 = vst.msk [vmem:[#allocation10] sm:$0xff] %vm176, %v909
    %911 = vst.msk [vmem:[#allocation10 + $0x8] sm:$0xff] %vm176, %v905
    %vm912 = vcmask 254976
    %913 = vst.msk [vmem:[#allocation10 + $0x10] sm:$0x3] %vm912, %v904
    // Predicated region
    $region42: #{tpu_custom_call.1} parent=1 // pred_check
      _
    $region43: #{tpu_custom_call.1} parent=1 // pred_check_branch
      %915 = sbr.rel (0) target = $region45
    $region44: #{tpu_custom_call.1} parent=1 // pred_region
      %s917 = ssub.s32 384, 384
      %918 = vsyncadd [#allocation4], %s917
      %s919 = sshll.u32 [#allocation10], 4
      %s920 = int_to_ptr.vmem [resolvable:$true] %s919
      %925 = dma.vmem_to_hbm [thread:$0]  %s920, 384, %s6, [#allocation4], 128, 128, 8
    $region45: #{tpu_custom_call.1} parent=1 // pred_fallthru
      _
    // Predicated region
    $region46: #{tpu_custom_call.1} parent=1 // pred_check
      _
    $region47: #{tpu_custom_call.1} parent=1 // pred_check_branch
      %927 = sbr.rel (0) target = $region49
    $region48: #{tpu_custom_call.1} parent=1 // pred_region
      %928 = dma.done [#allocation4], 384
    $region49: #{tpu_custom_call.1} parent=1 // pred_fallthru
      _
    %929 = vsyncpa [#allocation3], 1
    %930 = vsyncpa [#allocation6], 1
    %931 = vsyncpa [#allocation9], 1
    %932 = vsyncpa [#allocation4], 1

</llo_original>
